<compile_context>
chip_gen: v7x
topology: tpu7x:2x2x1
jax: 0.10.0
libtpu: 0.0.40
codegen_flags: <defaults>
</compile_context>

<pallas_src>
import numpy as np

import jax
import jax.numpy as jnp
from jax.experimental import pallas as pl
from jax.experimental.pallas import tpu as pltpu

NUM_QUBITS = 4
NUM_LAYERS = 6            # >= 5 (first block is always layers 0..3)
DIM = 2 ** NUM_QUBITS     # 16
BATCH = 256


# ----------------------------------------------------------------------------
# Pallas kernel: exactly 2 MXU dots, no loops / branches / masks
# ----------------------------------------------------------------------------
def mcm_circuit_kernel(psi_ref, w_ref, g_ref, out_ref):
    f32 = jnp.float32
    # y[:, :2D]   = [Re | Im](psi @ UA^T)                 (mid-circuit state)
    # y[:, 2D:10D]= [Re | Im]((P_k psi1) @ UB^T), k=0..3  (all collapse branches)
    y = jnp.dot(psi_ref[...], w_ref[...], preferred_element_type=f32)
    # |.|^2 grouped by measurement outcome; cols 0:4 = mid-circuit joint probs,
    # cols 4:8 = final joint probs (mixture over the 4 branches).
    out_ref[...] = jnp.dot(y * y, g_ref[...], preferred_element_type=f32)


def run_pallas(psi_re, w_all, g_all, *, tile_b=None):
    """psi_re: (B, D) real amplitudes. Returns (mcm_probs, fm_probs), each (B, 4)."""
    psi = psi_re.astype(jnp.float32)
    B, K = psi.shape
    if tile_b is None:
        # Single grid step (review: per-step overhead dominates at this size);
        # batch rounded up to a sublane multiple of 8.
        tile_b = ((B + 7) // 8) * 8
    Bp = ((B + tile_b - 1) // tile_b) * tile_b
    if Bp != B:
        psi = jnp.pad(psi, ((0, Bp - B), (0, 0)))   # zero rows -> zero probs
    N = w_all.shape[1]   # 10 * D

    cost = pl.CostEstimate(
        flops=2 * Bp * K * N + 2 * Bp * N * 8,
        transcendentals=0,
        bytes_accessed=4 * (Bp * K + K * N + N * 8 + Bp * 8))

    out = pl.pallas_call(
        mcm_circuit_kernel,
        out_shape=jax.ShapeDtypeStruct((Bp, 8), jnp.float32),
        grid=(Bp // tile_b,),
        in_specs=[pl.BlockSpec((tile_b, K), lambda i: (i, 0)),
                  pl.BlockSpec((K, N), lambda i: (0, 0)),
                  pl.BlockSpec((N, 8), lambda i: (0, 0))],
        out_specs=pl.BlockSpec((tile_b, 8), lambda i: (i, 0)),
        compiler_params=pltpu.CompilerParams(
            dimension_semantics=("parallel",)),
        cost_estimate=cost,
    )(psi, w_all, g_all)

    out = out[:B]
    return out[:, :4], out[:, 4:]


# ----------------------------------------------------------------------------
# Host-side (numpy, float64/complex128) circuit-unitary + constant folding.
# PennyLane convention: wire 0 = most significant bit of the state index.
# ----------------------------------------------------------------------------
def _rx(t):
    c, s = np.cos(t / 2), np.sin(t / 2)
    return np.array([[c, -1j * s], [-1j * s, c]], dtype=np.complex128)


def _ry(t):
    c, s = np.cos(t / 2), np.sin(t / 2)
    return np.array([[c, -s], [s, c]], dtype=np.complex128)


def _rz(t):
    e = np.exp(-1j * t / 2)
    return np.array([[e, 0.0], [0.0, np.conj(e)]], dtype=np.complex128)


def _cnot_full(n, control, target):
    D = 2 ** n
    U = np.zeros((D, D), dtype=np.complex128)
    for i in range(D):
        cbit = (i >> (n - 1 - control)) & 1
        j = i ^ (cbit << (n - 1 - target))
        U[j, i] = 1.0
    return U


def _layer_unitary(theta, n):
    # theta: (n, 3) -> RX, RY, RZ per wire, then CNOT ring j -> (j+1) % n
    U = np.array([[1.0 + 0j]])
    for j in range(n):                       # wire 0 is leftmost (MSB)
        single = _rz(theta[j, 2]) @ _ry(theta[j, 1]) @ _rx(theta[j, 0])
        U = np.kron(U, single)
    for j in range(n):
        U = _cnot_full(n, j, (j + 1) % n) @ U
    return U


def _block_unitary(params_list, n):
    U = np.eye(2 ** n, dtype=np.complex128)
    for theta in params_list:
        U = _layer_unitary(theta, n) @ U
    return U


def _pair_masks(n, wires):
    # masks[k, i] = 1 if (bit(wires[0]), bit(wires[1])) of basis index i == k
    # (first wire of the pair is the MSB of the outcome, as in qml.probs(op=[m0,m1]))
    D = 2 ** n
    idx = np.arange(D)
    b0 = (idx >> (n - 1 - wires[0])) & 1
    b1 = (idx >> (n - 1 - wires[1])) & 1
    outcome = b0 * 2 + b1
    return np.stack([(outcome == k).astype(np.float64) for k in range(4)])


def build_kernel_constants(params_np, n):
    """Returns f32 (W_all, G_all) for the kernel plus f64/c128 reference pieces."""
    D = 2 ** n
    UA = _block_unitary(params_np[:4], n)          # layers 0..3     (D, D) c128
    UB = _block_unitary(params_np[4:], n)          # layers 4..L-1
    masks_mcm = _pair_masks(n, (0, 1))             # (4, D)
    masks_fm = _pair_masks(n, (2, 3))              # (4, D)

    # Real-input half block: psi_re @ ua_half = [Re | Im](psi @ UA^T)   (D, 2D)
    UAT = UA.T
    ua_half = np.concatenate([UAT.real, UAT.imag], axis=1)

    # Complex block of UB^T: [xr | xi] @ mb = [Re | Im](x @ UB^T)       (2D, 2D)
    UBT = UB.T
    mb = np.block([[UBT.real, UBT.imag], [-UBT.imag, UBT.real]])

    # Fold the 4 mid-circuit collapse branches: (2D, 8D)
    mask2 = np.concatenate([masks_mcm, masks_mcm], axis=1)              # (4, 2D)
    wb = np.concatenate([mask2[k][:, None] * mb for k in range(4)], axis=1)

    # Fold UA into the branch matrix: y = psi_re @ W_all                (D, 10D)
    w_all = np.concatenate([ua_half, ua_half @ wb], axis=1)

    # Merged outcome-grouping matrix (10D, 8): rows 0:2D -> mid-circuit probs
    # (cols 0:4), rows 2D:10D -> final probs (cols 4:8). No zero-padded dots.
    gm = np.concatenate([masks_mcm.T, masks_mcm.T], axis=0)             # (2D, 4)
    gf = np.tile(np.concatenate([masks_fm.T, masks_fm.T], axis=0), (4, 1))  # (8D, 4)
    g_all = np.zeros((10 * D, 8), dtype=np.float64)
    g_all[:2 * D, :4] = gm
    g_all[2 * D:, 4:] = gf

    return (jnp.asarray(w_all, dtype=jnp.float32),
            jnp.asarray(g_all, dtype=jnp.float32),
            UA, UB, masks_mcm, masks_fm)


# ----------------------------------------------------------------------------
if __name__ == "__main__":
    key = jax.random.PRNGKey(0)
    pkeys = jax.random.split(key, NUM_LAYERS + 1)

    # Deterministic parameter init (mirrors torch.rand(num_qubits, 3) per layer)
    params = [np.asarray(
        jax.random.uniform(pkeys[i], (NUM_QUBITS, 3), dtype=jnp.float32),
        dtype=np.float64) for i in range(NUM_LAYERS)]

    # Input state: batch of real amplitude vectors, L2-normalized along dim 1
    data = jax.random.normal(pkeys[-1], (BATCH, DIM), dtype=jnp.float32)
    data = data / jnp.linalg.norm(data, axis=1, keepdims=True)

    w_all, g_all, UA, UB, masks_mcm, masks_fm = build_kernel_constants(
        params, NUM_QUBITS)

    mcm_probs, fm_probs = run_pallas(data, w_all, g_all)
    jax.block_until_ready((mcm_probs, fm_probs))

    # Pure numpy (float64/complex128) reference, same deferred-measurement
    # semantics as PennyLane's default.qubit analytic mode.
    psi = np.asarray(data, dtype=np.float64).astype(np.complex128)
    psi1 = psi @ UA.T
    mcm_ref = (np.abs(psi1) ** 2) @ masks_mcm.T
    acc = np.zeros((BATCH, DIM), dtype=np.float64)
    for k in range(4):
        phi = (psi1 * masks_mcm[k][None, :]) @ UB.T
        acc = acc + np.abs(phi) ** 2
    fm_ref = acc @ masks_fm.T

    mcm_np = np.asarray(mcm_probs)
    fm_np = np.asarray(fm_probs)
    assert mcm_np.shape == (BATCH, 4) and fm_np.shape == (BATCH, 4)
    assert np.allclose(mcm_np, mcm_ref, atol=1e-5)
    assert np.allclose(fm_np, fm_ref, atol=1e-5)
    assert np.allclose(mcm_np.sum(axis=1), 1.0, atol=1e-4)
    assert np.allclose(fm_np.sum(axis=1), 1.0, atol=1e-4)

    print("KERNEL_OK")
</pallas_src>

<mosaic_0001>
module attributes {stable_mosaic.version = 11 : i64} {
  func.func @mcm_circuit_kernel(%arg0: i32, %arg1: memref<256x16xf32, #tpu.memory_space<vmem>>, %arg2: memref<16x160xf32, #tpu.memory_space<vmem>>, %arg3: memref<160x8xf32, #tpu.memory_space<vmem>>, %arg4: memref<256x8xf32, #tpu.memory_space<vmem>>) attributes {dimension_semantics = [#tpu.dimension_semantics<parallel>], iteration_bounds = array<i64: 1>, scalar_prefetch = 0 : i64, scratch_operands = 0 : i64, tpu.core_type = #tpu.core_type<tc>, window_params = [{transform_indices = @transform_0, window_bounds = array<i64: 256, 16>}, {pipeline_mode = #tpu.pipeline_mode<synchronous>, transform_indices = @transform_1, window_bounds = array<i64: 16, 160>}, {pipeline_mode = #tpu.pipeline_mode<synchronous>, transform_indices = @transform_2, window_bounds = array<i64: 160, 8>}, {transform_indices = @transform_3, window_bounds = array<i64: 256, 8>}]} {
    %c0 = arith.constant 0 : index
    %c0_0 = arith.constant 0 : index
    %0 = vector.load %arg1[%c0, %c0_0] : memref<256x16xf32, #tpu.memory_space<vmem>>, vector<256x16xf32>
    %c0_1 = arith.constant 0 : index
    %c0_2 = arith.constant 0 : index
    %1 = vector.load %arg2[%c0_1, %c0_2] : memref<16x160xf32, #tpu.memory_space<vmem>>, vector<16x160xf32>
    %cst = arith.constant dense<0.000000e+00> : vector<256x160xf32>
    %2 = tpu.matmul %0, %1, %cst {dimension_numbers = #tpu.dot_dimension_numbers<[1], [0], [0], [1], [0, 0, 1, 1], [], []>} : vector<256x16xf32>, vector<16x160xf32>, vector<256x160xf32> -> vector<256x160xf32>
    %3 = arith.mulf %2, %2 : vector<256x160xf32>
    %c0_3 = arith.constant 0 : index
    %c0_4 = arith.constant 0 : index
    %4 = vector.load %arg3[%c0_3, %c0_4] : memref<160x8xf32, #tpu.memory_space<vmem>>, vector<160x8xf32>
    %cst_5 = arith.constant dense<0.000000e+00> : vector<256x8xf32>
    %5 = tpu.matmul %3, %4, %cst_5 {dimension_numbers = #tpu.dot_dimension_numbers<[1], [0], [0], [1], [0, 0, 1, 1], [], []>} : vector<256x160xf32>, vector<160x8xf32>, vector<256x8xf32> -> vector<256x8xf32>
    %c0_6 = arith.constant 0 : index
    %c0_7 = arith.constant 0 : index
    %6 = vector.load %arg4[%c0_6, %c0_7] : memref<256x8xf32, #tpu.memory_space<vmem>>, vector<256x8xf32>
    tpu.vector_store %arg4[%c0_6, %c0_7], %5 {strides = array<i32>} : memref<256x8xf32, #tpu.memory_space<vmem>>, vector<256x8xf32>,
    return
  }
  func.func @transform_0(%arg0: i32) -> (i32, i32) {
    %c0_i32 = arith.constant 0 : i32
    %c0_i32_0 = arith.constant 0 : i32
    return %arg0, %c0_i32 : i32, i32
  }
  func.func @transform_1(%arg0: i32) -> (i32, i32) {
    %c0_i32 = arith.constant 0 : i32
    %c0_i32_0 = arith.constant 0 : i32
    %c0_i32_1 = arith.constant 0 : i32
    return %c0_i32, %c0_i32_0 : i32, i32
  }
  func.func @transform_2(%arg0: i32) -> (i32, i32) {
    %c0_i32 = arith.constant 0 : i32
    %c0_i32_0 = arith.constant 0 : i32
    %c0_i32_1 = arith.constant 0 : i32
    return %c0_i32, %c0_i32_0 : i32, i32
  }
  func.func @transform_3(%arg0: i32) -> (i32, i32) {
    %c0_i32 = arith.constant 0 : i32
    %c0_i32_0 = arith.constant 0 : i32
    return %arg0, %c0_i32 : i32, i32
  }
}

</mosaic_0001>

<llo_original>
// kernel: tpu_custom_call.1
$region0: #{tpu_custom_call.1}
  #allocation0 [shape = 'u32[]', space=smem, size = 0x4, offset = 0x4, fixed_abs, tag = 'smem constant byte address 0x4 - core index']
  #allocation1 [shape = 'u32[144,128]{1,0:T(1,128)}', space=vmem, size = 0x12000, scoped, tag = 'internal scratch']
  %s0 = inlined_call_operand.vmem [shape: f32[256,16], index: 0, kind: input, shape index: {}]
  %s1 = inlined_call_operand.vmem [shape: f32[16,160], index: 1, kind: input, shape index: {}]
  %s2 = inlined_call_operand.vmem [shape: f32[160,8], index: 2, kind: input, shape index: {}]
  %s3 = inlined_call_operand.vmem [shape: f32[256,8], index: 3, kind: output, shape index: {}]
  %s4 = sld [smem:[#allocation0]]
  $region22: #{tpu_custom_call.1} parent=0
    _
  %s6 = ssub.s32 1, %s4
  %s7 = scalar_select 0, %s6, %s4
  // Predicated region
  $region2: #{tpu_custom_call.1} parent=0 // pred_check
    _
  $region3: #{tpu_custom_call.1} parent=0 // pred_check_branch
    %9 = sbr.rel (0) target = $region5
  $region4: #{tpu_custom_call.1} parent=0 // pred_region
    _
  $region5: #{tpu_custom_call.1} parent=0 // pred_fallthru
    _
  // Predicated region
  $region6: #{tpu_custom_call.1} parent=0 // pred_check
    _
  $region7: #{tpu_custom_call.1} parent=0 // pred_check_branch
    %11 = sbr.rel (0) target = $region9
  $region8: #{tpu_custom_call.1} parent=0 // pred_region
    _
  $region9: #{tpu_custom_call.1} parent=0 // pred_fallthru
    _
  // Predicated region
  $region10: #{tpu_custom_call.1} parent=0 // pred_check
    _
  $region11: #{tpu_custom_call.1} parent=0 // pred_check_branch
    %13 = sbr.rel (0) target = $region13
  $region12: #{tpu_custom_call.1} parent=0 // pred_region
    _
  $region13: #{tpu_custom_call.1} parent=0 // pred_fallthru
    _
  %v14 = vld [vmem:[%s0] sm:$0xff]
  %v15 = vld [vmem:[%s0 + $0x8] sm:$0xff]
  %v16 = vld [vmem:[%s0 + $0x10] sm:$0xff]
  %v17 = vld [vmem:[%s0 + $0x18] sm:$0xff]
  %v18 = vld [vmem:[%s0 + $0x20] sm:$0xff]
  %v19 = vld [vmem:[%s0 + $0x28] sm:$0xff]
  %v20 = vld [vmem:[%s0 + $0x30] sm:$0xff]
  %v21 = vld [vmem:[%s0 + $0x38] sm:$0xff]
  %v22 = vld [vmem:[%s0 + $0x40] sm:$0xff]
  %v23 = vld [vmem:[%s0 + $0x48] sm:$0xff]
  %v24 = vld [vmem:[%s0 + $0x50] sm:$0xff]
  %v25 = vld [vmem:[%s0 + $0x58] sm:$0xff]
  %v26 = vld [vmem:[%s0 + $0x60] sm:$0xff]
  %v27 = vld [vmem:[%s0 + $0x68] sm:$0xff]
  %v28 = vld [vmem:[%s0 + $0x70] sm:$0xff]
  %v29 = vld [vmem:[%s0 + $0x78] sm:$0xff]
  %v30 = vld [vmem:[%s0 + $0x80] sm:$0xff]
  %v31 = vld [vmem:[%s0 + $0x88] sm:$0xff]
  %v32 = vld [vmem:[%s0 + $0x90] sm:$0xff]
  %v33 = vld [vmem:[%s0 + $0x98] sm:$0xff]
  %v34 = vld [vmem:[%s0 + $0xa0] sm:$0xff]
  %v35 = vld [vmem:[%s0 + $0xa8] sm:$0xff]
  %v36 = vld [vmem:[%s0 + $0xb0] sm:$0xff]
  %v37 = vld [vmem:[%s0 + $0xb8] sm:$0xff]
  %v38 = vld [vmem:[%s0 + $0xc0] sm:$0xff]
  %v39 = vld [vmem:[%s0 + $0xc8] sm:$0xff]
  %v40 = vld [vmem:[%s0 + $0xd0] sm:$0xff]
  %v41 = vld [vmem:[%s0 + $0xd8] sm:$0xff]
  %v42 = vld [vmem:[%s0 + $0xe0] sm:$0xff]
  %v43 = vld [vmem:[%s0 + $0xe8] sm:$0xff]
  %v44 = vld [vmem:[%s0 + $0xf0] sm:$0xff]
  %v45 = vld [vmem:[%s0 + $0xf8] sm:$0xff]
  %v46 = vld [vmem:[%s1] sm:$0xff]
  %v47 = vld [vmem:[%s1 + $0x8] sm:$0xff]
  %v48 = vld [vmem:[%s1 + $0x10] sm:$0xff]
  %v49 = vld [vmem:[%s1 + $0x18] sm:$0xff]
  %vm50 = vcmask 130048
  %v52 = vsel %vm50, %v14, 0
  %v55 = vsel %vm50, %v15, 0
  %v58 = vsel %vm50, %v16, 0
  %v61 = vsel %vm50, %v17, 0
  %v64 = vsel %vm50, %v18, 0
  %v67 = vsel %vm50, %v19, 0
  %v70 = vsel %vm50, %v20, 0
  %v73 = vsel %vm50, %v21, 0
  %v76 = vsel %vm50, %v22, 0
  %v79 = vsel %vm50, %v23, 0
  %v82 = vsel %vm50, %v24, 0
  %v85 = vsel %vm50, %v25, 0
  %v88 = vsel %vm50, %v26, 0
  %v91 = vsel %vm50, %v27, 0
  %v94 = vsel %vm50, %v28, 0
  %v97 = vsel %vm50, %v29, 0
  %v100 = vsel %vm50, %v30, 0
  %v103 = vsel %vm50, %v31, 0
  %v106 = vsel %vm50, %v32, 0
  %v109 = vsel %vm50, %v33, 0
  %v112 = vsel %vm50, %v34, 0
  %v115 = vsel %vm50, %v35, 0
  %v118 = vsel %vm50, %v36, 0
  %v121 = vsel %vm50, %v37, 0
  %v124 = vsel %vm50, %v38, 0
  %v127 = vsel %vm50, %v39, 0
  %v130 = vsel %vm50, %v40, 0
  %v133 = vsel %vm50, %v41, 0
  %v136 = vsel %vm50, %v42, 0
  %v139 = vsel %vm50, %v43, 0
  %v142 = vsel %vm50, %v44, 0
  %v145 = vsel %vm50, %v45, 0
  %147 = vmatprep.subr.mxu0 %v47
  %148 = vmatpush1.msra.mxu0 %v46
  %149 = vmatprep.subr.mxu0 %v49
  %150 = vmatpush1.msra.mxu0 %v48
  %151 = vmatprep.subr.mxu0 0.0
  %152 = vmatpush1.msra.mxu0 0.0
  %153 = vmatprep.subr.mxu0 0.0
  %154 = vmatpush1.msra.mxu0 0.0
  %155 = vmatprep.subr.mxu0 0.0
  %156 = vmatpush1.msra.mxu0 0.0
  %157 = vmatprep.subr.mxu0 0.0
  %158 = vmatpush1.msra.mxu0 0.0
  %159 = vmatprep.subr.mxu0 0.0
  %160 = vmatpush1.msra.mxu0 0.0
  %161 = vmatprep.subr.mxu0 0.0
  %162 = vmatpush1.msra.mxu0 0.0
  %163 = vmatprep.subr.mxu0 0.0
  %164 = vmatpush1.msra.mxu0 0.0
  %165 = vmatprep.subr.mxu0 0.0
  %166 = vmatpush1.msra.mxu0 0.0
  %167 = vmatprep.subr.mxu0 0.0
  %168 = vmatpush1.msra.mxu0 0.0
  %169 = vmatprep.subr.mxu0 0.0
  %170 = vmatpush1.msra.mxu0 0.0
  %171 = vmatprep.subr.mxu0 0.0
  %172 = vmatpush1.msra.mxu0 0.0
  %173 = vmatprep.subr.mxu0 0.0
  %174 = vmatpush1.msra.mxu0 0.0
  %175 = vmatprep.subr.mxu0 0.0
  %176 = vmatpush1.msra.mxu0 0.0
  %177 = vmatprep.subr.mxu0 0.0
  %178 = vmatpush1.msra.mxu0 0.0
  %179 = vmatprep.subr.mxu0 0.0
  %180 = vmatpush1.msra.mxu0 0.0
  %181 = vmatprep.subr.mxu0 0.0
  %182 = vmatpush1.msra.mxu0 0.0
  %183 = vmatprep.subr.mxu0 0.0
  %184 = vmatpush1.msra.mxu0 0.0
  %185 = vmatprep.subr.mxu0 0.0
  %186 = vmatpush1.msra.mxu0 0.0
  %187 = vmatprep.subr.mxu0 0.0
  %188 = vmatpush1.msra.mxu0 0.0
  %189 = vmatprep.subr.mxu0 0.0
  %190 = vmatpush1.msra.mxu0 0.0
  %191 = vmatprep.subr.mxu0 0.0
  %192 = vmatpush1.msra.mxu0 0.0
  %193 = vmatprep.subr.mxu0 0.0
  %194 = vmatpush1.msra.mxu0 0.0
  %195 = vmatprep.subr.mxu0 0.0
  %196 = vmatpush1.msra.mxu0 0.0
  %197 = vmatprep.subr.mxu0 0.0
  %198 = vmatpush1.msra.mxu0 0.0
  %199 = vmatprep.subr.mxu0 0.0
  %200 = vmatpush1.msra.mxu0 0.0
  %201 = vmatprep.subr.mxu0 0.0
  %202 = vmatpush1.msra.mxu0 0.0
  %203 = vmatprep.subr.mxu0 0.0
  %204 = vmatpush1.msra.mxu0 0.0
  %205 = vmatprep.subr.mxu0 0.0
  %206 = vmatpush1.msra.mxu0 0.0
  %207 = vmatprep.subr.mxu0 0.0
  %208 = vmatpush1.msra.mxu0 0.0
  %209 = vmatprep.subr.mxu0 0.0
  %210 = vmatpush1.msra.mxu0 0.0
  %211 = vmatprep.mubr.f32.mxu0 0.0
  %212 = vmatmul.mubr.f32.gmra.mrb[0].mxu0 %v52
  %v213 = vpop.f32.mrb[0].mxu0
  %v214 = vadd.f32 0.0, %v213
  %v215 = vpop.f32.mrb[0].mxu0
  %v216 = vadd.f32 0.0, %v215
  %217 = vmatprep.mubr.f32.mxu0 0.0
  %218 = vmatmul.mubr.f32.gmra.mrb[0].mxu0 %v55
  %v219 = vpop.f32.mrb[0].mxu0
  %v220 = vadd.f32 0.0, %v219
  %v221 = vpop.f32.mrb[0].mxu0
  %v222 = vadd.f32 0.0, %v221
  %223 = vmatprep.mubr.f32.mxu0 0.0
  %224 = vmatmul.mubr.f32.gmra.mrb[0].mxu0 %v58
  %v225 = vpop.f32.mrb[0].mxu0
  %v226 = vadd.f32 0.0, %v225
  %v227 = vpop.f32.mrb[0].mxu0
  %v228 = vadd.f32 0.0, %v227
  %229 = vmatprep.mubr.f32.mxu0 0.0
  %230 = vmatmul.mubr.f32.gmra.mrb[0].mxu0 %v61
  %v231 = vpop.f32.mrb[0].mxu0
  %v232 = vadd.f32 0.0, %v231
  %v233 = vpop.f32.mrb[0].mxu0
  %v234 = vadd.f32 0.0, %v233
  %235 = vmatprep.mubr.f32.mxu0 0.0
  %236 = vmatmul.mubr.f32.gmra.mrb[0].mxu0 %v64
  %v237 = vpop.f32.mrb[0].mxu0
  %v238 = vadd.f32 0.0, %v237
  %v239 = vpop.f32.mrb[0].mxu0
  %v240 = vadd.f32 0.0, %v239
  %241 = vmatprep.mubr.f32.mxu0 0.0
  %242 = vmatmul.mubr.f32.gmra.mrb[0].mxu0 %v67
  %v243 = vpop.f32.mrb[0].mxu0
  %v244 = vadd.f32 0.0, %v243
  %v245 = vpop.f32.mrb[0].mxu0
  %v246 = vadd.f32 0.0, %v245
  %247 = vmatprep.mubr.f32.mxu0 0.0
  %248 = vmatmul.mubr.f32.gmra.mrb[0].mxu0 %v70
  %v249 = vpop.f32.mrb[0].mxu0
  %v250 = vadd.f32 0.0, %v249
  %v251 = vpop.f32.mrb[0].mxu0
  %v252 = vadd.f32 0.0, %v251
  %253 = vmatprep.mubr.f32.mxu0 0.0
  %254 = vmatmul.mubr.f32.gmra.mrb[0].mxu0 %v73
  %v255 = vpop.f32.mrb[0].mxu0
  %v256 = vadd.f32 0.0, %v255
  %v257 = vpop.f32.mrb[0].mxu0
  %v258 = vadd.f32 0.0, %v257
  %259 = vmatprep.mubr.f32.mxu0 0.0
  %260 = vmatmul.mubr.f32.gmra.mrb[0].mxu0 %v76
  %v261 = vpop.f32.mrb[0].mxu0
  %v262 = vadd.f32 0.0, %v261
  %v263 = vpop.f32.mrb[0].mxu0
  %v264 = vadd.f32 0.0, %v263
  %265 = vmatprep.mubr.f32.mxu0 0.0
  %266 = vmatmul.mubr.f32.gmra.mrb[0].mxu0 %v79
  %v267 = vpop.f32.mrb[0].mxu0
  %v268 = vadd.f32 0.0, %v267
  %v269 = vpop.f32.mrb[0].mxu0
  %v270 = vadd.f32 0.0, %v269
  %271 = vmatprep.mubr.f32.mxu0 0.0
  %272 = vmatmul.mubr.f32.gmra.mrb[0].mxu0 %v82
  %v273 = vpop.f32.mrb[0].mxu0
  %v274 = vadd.f32 0.0, %v273
  %v275 = vpop.f32.mrb[0].mxu0
  %v276 = vadd.f32 0.0, %v275
  %277 = vmatprep.mubr.f32.mxu0 0.0
  %278 = vmatmul.mubr.f32.gmra.mrb[0].mxu0 %v85
  %v279 = vpop.f32.mrb[0].mxu0
  %v280 = vadd.f32 0.0, %v279
  %v281 = vpop.f32.mrb[0].mxu0
  %v282 = vadd.f32 0.0, %v281
  %283 = vmatprep.mubr.f32.mxu0 0.0
  %284 = vmatmul.mubr.f32.gmra.mrb[0].mxu0 %v88
  %v285 = vpop.f32.mrb[0].mxu0
  %v286 = vadd.f32 0.0, %v285
  %v287 = vpop.f32.mrb[0].mxu0
  %v288 = vadd.f32 0.0, %v287
  %289 = vmatprep.mubr.f32.mxu0 0.0
  %290 = vmatmul.mubr.f32.gmra.mrb[0].mxu0 %v91
  %v291 = vpop.f32.mrb[0].mxu0
  %v292 = vadd.f32 0.0, %v291
  %v293 = vpop.f32.mrb[0].mxu0
  %v294 = vadd.f32 0.0, %v293
  %295 = vmatprep.mubr.f32.mxu0 0.0
  %296 = vmatmul.mubr.f32.gmra.mrb[0].mxu0 %v94
  %v297 = vpop.f32.mrb[0].mxu0
  %v298 = vadd.f32 0.0, %v297
  %v299 = vpop.f32.mrb[0].mxu0
  %v300 = vadd.f32 0.0, %v299
  %301 = vmatprep.mubr.f32.mxu0 0.0
  %302 = vmatmul.mubr.f32.gmra.mrb[0].mxu0 %v97
  %v303 = vpop.f32.mrb[0].mxu0
  %v304 = vadd.f32 0.0, %v303
  %v305 = vpop.f32.mrb[0].mxu0
  %v306 = vadd.f32 0.0, %v305
  %307 = vmatprep.mubr.f32.mxu0 0.0
  %308 = vmatmul.mubr.f32.gmra.mrb[0].mxu0 %v100
  %v309 = vpop.f32.mrb[0].mxu0
  %v310 = vadd.f32 0.0, %v309
  %v311 = vpop.f32.mrb[0].mxu0
  %v312 = vadd.f32 0.0, %v311
  %313 = vmatprep.mubr.f32.mxu0 0.0
  %314 = vmatmul.mubr.f32.gmra.mrb[0].mxu0 %v103
  %v315 = vpop.f32.mrb[0].mxu0
  %v316 = vadd.f32 0.0, %v315
  %v317 = vpop.f32.mrb[0].mxu0
  %v318 = vadd.f32 0.0, %v317
  %319 = vmatprep.mubr.f32.mxu0 0.0
  %320 = vmatmul.mubr.f32.gmra.mrb[0].mxu0 %v106
  %v321 = vpop.f32.mrb[0].mxu0
  %v322 = vadd.f32 0.0, %v321
  %v323 = vpop.f32.mrb[0].mxu0
  %v324 = vadd.f32 0.0, %v323
  %325 = vmatprep.mubr.f32.mxu0 0.0
  %326 = vmatmul.mubr.f32.gmra.mrb[0].mxu0 %v109
  %v327 = vpop.f32.mrb[0].mxu0
  %v328 = vadd.f32 0.0, %v327
  %v329 = vpop.f32.mrb[0].mxu0
  %v330 = vadd.f32 0.0, %v329
  %331 = vmatprep.mubr.f32.mxu0 0.0
  %332 = vmatmul.mubr.f32.gmra.mrb[0].mxu0 %v112
  %v333 = vpop.f32.mrb[0].mxu0
  %v334 = vadd.f32 0.0, %v333
  %v335 = vpop.f32.mrb[0].mxu0
  %v336 = vadd.f32 0.0, %v335
  %337 = vmatprep.mubr.f32.mxu0 0.0
  %338 = vmatmul.mubr.f32.gmra.mrb[0].mxu0 %v115
  %v339 = vpop.f32.mrb[0].mxu0
  %v340 = vadd.f32 0.0, %v339
  %v341 = vpop.f32.mrb[0].mxu0
  %v342 = vadd.f32 0.0, %v341
  %343 = vmatprep.mubr.f32.mxu0 0.0
  %344 = vmatmul.mubr.f32.gmra.mrb[0].mxu0 %v118
  %v345 = vpop.f32.mrb[0].mxu0
  %v346 = vadd.f32 0.0, %v345
  %v347 = vpop.f32.mrb[0].mxu0
  %v348 = vadd.f32 0.0, %v347
  %349 = vmatprep.mubr.f32.mxu0 0.0
  %350 = vmatmul.mubr.f32.gmra.mrb[0].mxu0 %v121
  %v351 = vpop.f32.mrb[0].mxu0
  %v352 = vadd.f32 0.0, %v351
  %v353 = vpop.f32.mrb[0].mxu0
  %v354 = vadd.f32 0.0, %v353
  %355 = vmatprep.mubr.f32.mxu0 0.0
  %356 = vmatmul.mubr.f32.gmra.mrb[0].mxu0 %v124
  %v357 = vpop.f32.mrb[0].mxu0
  %v358 = vadd.f32 0.0, %v357
  %v359 = vpop.f32.mrb[0].mxu0
  %v360 = vadd.f32 0.0, %v359
  %361 = vmatprep.mubr.f32.mxu0 0.0
  %362 = vmatmul.mubr.f32.gmra.mrb[0].mxu0 %v127
  %v363 = vpop.f32.mrb[0].mxu0
  %v364 = vadd.f32 0.0, %v363
  %v365 = vpop.f32.mrb[0].mxu0
  %v366 = vadd.f32 0.0, %v365
  %367 = vmatprep.mubr.f32.mxu0 0.0
  %368 = vmatmul.mubr.f32.gmra.mrb[0].mxu0 %v130
  %v369 = vpop.f32.mrb[0].mxu0
  %v370 = vadd.f32 0.0, %v369
  %v371 = vpop.f32.mrb[0].mxu0
  %v372 = vadd.f32 0.0, %v371
  %373 = vmatprep.mubr.f32.mxu0 0.0
  %374 = vmatmul.mubr.f32.gmra.mrb[0].mxu0 %v133
  %v375 = vpop.f32.mrb[0].mxu0
  %v376 = vadd.f32 0.0, %v375
  %v377 = vpop.f32.mrb[0].mxu0
  %v378 = vadd.f32 0.0, %v377
  %379 = vmatprep.mubr.f32.mxu0 0.0
  %380 = vmatmul.mubr.f32.gmra.mrb[0].mxu0 %v136
  %v381 = vpop.f32.mrb[0].mxu0
  %v382 = vadd.f32 0.0, %v381
  %v383 = vpop.f32.mrb[0].mxu0
  %v384 = vadd.f32 0.0, %v383
  %385 = vmatprep.mubr.f32.mxu0 0.0
  %386 = vmatmul.mubr.f32.gmra.mrb[0].mxu0 %v139
  %v387 = vpop.f32.mrb[0].mxu0
  %v388 = vadd.f32 0.0, %v387
  %v389 = vpop.f32.mrb[0].mxu0
  %v390 = vadd.f32 0.0, %v389
  %391 = vmatprep.mubr.f32.mxu0 0.0
  %392 = vmatmul.mubr.f32.gmra.mrb[0].mxu0 %v142
  %v393 = vpop.f32.mrb[0].mxu0
  %v394 = vadd.f32 0.0, %v393
  %v395 = vpop.f32.mrb[0].mxu0
  %v396 = vadd.f32 0.0, %v395
  %397 = vmatprep.mubr.f32.mxu0 0.0
  %398 = vmatmul.mubr.f32.gmra.mrb[0].mxu0 %v145
  %v399 = vpop.f32.mrb[0].mxu0
  %v400 = vadd.f32 0.0, %v399
  %v401 = vpop.f32.mrb[0].mxu0
  %v402 = vadd.f32 0.0, %v401
  %403 = vdwg.mxu0
  %v404 = vmul.f32 %v214, %v214
  %v405 = vmul.f32 %v216, %v216
  %v406 = vmul.f32 %v220, %v220
  %v407 = vmul.f32 %v222, %v222
  %v408 = vmul.f32 %v226, %v226
  %v409 = vmul.f32 %v228, %v228
  %v410 = vmul.f32 %v232, %v232
  %v411 = vmul.f32 %v234, %v234
  %v412 = vmul.f32 %v238, %v238
  %v413 = vmul.f32 %v240, %v240
  %v414 = vmul.f32 %v244, %v244
  %v415 = vmul.f32 %v246, %v246
  %v416 = vmul.f32 %v250, %v250
  %v417 = vmul.f32 %v252, %v252
  %v418 = vmul.f32 %v256, %v256
  %v419 = vmul.f32 %v258, %v258
  %v420 = vmul.f32 %v262, %v262
  %v421 = vmul.f32 %v264, %v264
  %v422 = vmul.f32 %v268, %v268
  %v423 = vmul.f32 %v270, %v270
  %v424 = vmul.f32 %v274, %v274
  %v425 = vmul.f32 %v276, %v276
  %v426 = vmul.f32 %v280, %v280
  %v427 = vmul.f32 %v282, %v282
  %v428 = vmul.f32 %v286, %v286
  %v429 = vmul.f32 %v288, %v288
  %v430 = vmul.f32 %v292, %v292
  %v431 = vmul.f32 %v294, %v294
  %v432 = vmul.f32 %v298, %v298
  %v433 = vmul.f32 %v300, %v300
  %v434 = vmul.f32 %v304, %v304
  %v435 = vmul.f32 %v306, %v306
  %v436 = vmul.f32 %v310, %v310
  %v437 = vmul.f32 %v312, %v312
  %v438 = vmul.f32 %v316, %v316
  %v439 = vmul.f32 %v318, %v318
  %v440 = vmul.f32 %v322, %v322
  %v441 = vmul.f32 %v324, %v324
  %v442 = vmul.f32 %v328, %v328
  %v443 = vmul.f32 %v330, %v330
  %v444 = vmul.f32 %v334, %v334
  %v445 = vmul.f32 %v336, %v336
  %v446 = vmul.f32 %v340, %v340
  %v447 = vmul.f32 %v342, %v342
  %v448 = vmul.f32 %v346, %v346
  %v449 = vmul.f32 %v348, %v348
  %v450 = vmul.f32 %v352, %v352
  %v451 = vmul.f32 %v354, %v354
  %v452 = vmul.f32 %v358, %v358
  %v453 = vmul.f32 %v360, %v360
  %v454 = vmul.f32 %v364, %v364
  %v455 = vmul.f32 %v366, %v366
  %v456 = vmul.f32 %v370, %v370
  %v457 = vmul.f32 %v372, %v372
  %v458 = vmul.f32 %v376, %v376
  %v459 = vmul.f32 %v378, %v378
  %v460 = vmul.f32 %v382, %v382
  %v461 = vmul.f32 %v384, %v384
  %v462 = vmul.f32 %v388, %v388
  %v463 = vmul.f32 %v390, %v390
  %v464 = vmul.f32 %v394, %v394
  %v465 = vmul.f32 %v396, %v396
  %v466 = vmul.f32 %v400, %v400
  %v467 = vmul.f32 %v402, %v402
  %v468 = vld [vmem:[%s2] sm:$0xff]
  %v469 = vld [vmem:[%s2 + $0x8] sm:$0xff]
  %v470 = vld [vmem:[%s2 + $0x10] sm:$0xff]
  %v471 = vld [vmem:[%s2 + $0x18] sm:$0xff]
  %v472 = vld [vmem:[%s2 + $0x20] sm:$0xff]
  %v473 = vld [vmem:[%s2 + $0x28] sm:$0xff]
  %v474 = vld [vmem:[%s2 + $0x30] sm:$0xff]
  %v475 = vld [vmem:[%s2 + $0x38] sm:$0xff]
  %v476 = vld [vmem:[%s2 + $0x40] sm:$0xff]
  %v477 = vld [vmem:[%s2 + $0x48] sm:$0xff]
  %v478 = vld [vmem:[%s2 + $0x50] sm:$0xff]
  %v479 = vld [vmem:[%s2 + $0x58] sm:$0xff]
  %v480 = vld [vmem:[%s2 + $0x60] sm:$0xff]
  %v481 = vld [vmem:[%s2 + $0x68] sm:$0xff]
  %v482 = vld [vmem:[%s2 + $0x70] sm:$0xff]
  %v483 = vld [vmem:[%s2 + $0x78] sm:$0xff]
  %v484 = vld [vmem:[%s2 + $0x80] sm:$0xff]
  %v485 = vld [vmem:[%s2 + $0x88] sm:$0xff]
  %v486 = vld [vmem:[%s2 + $0x90] sm:$0xff]
  %v487 = vld [vmem:[%s2 + $0x98] sm:$0xff]
  %vm488 = vcmask 261120
  %v490 = vsel %vm488, %v405, 0
  %v493 = vsel %vm488, %v407, 0
  %v496 = vsel %vm488, %v409, 0
  %v499 = vsel %vm488, %v411, 0
  %v502 = vsel %vm488, %v413, 0
  %v505 = vsel %vm488, %v415, 0
  %v508 = vsel %vm488, %v417, 0
  %v511 = vsel %vm488, %v419, 0
  %v514 = vsel %vm488, %v421, 0
  %v517 = vsel %vm488, %v423, 0
  %v520 = vsel %vm488, %v425, 0
  %v523 = vsel %vm488, %v427, 0
  %v526 = vsel %vm488, %v429, 0
  %v529 = vsel %vm488, %v431, 0
  %v532 = vsel %vm488, %v433, 0
  %v535 = vsel %vm488, %v435, 0
  %v538 = vsel %vm488, %v437, 0
  %v541 = vsel %vm488, %v439, 0
  %v544 = vsel %vm488, %v441, 0
  %v547 = vsel %vm488, %v443, 0
  %v550 = vsel %vm488, %v445, 0
  %v553 = vsel %vm488, %v447, 0
  %v556 = vsel %vm488, %v449, 0
  %v559 = vsel %vm488, %v451, 0
  %v562 = vsel %vm488, %v453, 0
  %v565 = vsel %vm488, %v455, 0
  %v568 = vsel %vm488, %v457, 0
  %v571 = vsel %vm488, %v459, 0
  %v574 = vsel %vm488, %v461, 0
  %v577 = vsel %vm488, %v463, 0
  %v580 = vsel %vm488, %v465, 0
  %v583 = vsel %vm488, %v467, 0
  %585 = vmatprep.subr.mxu0 0.0
  %586 = vmatpush1.msra.mxu0 %v468
  %587 = vmatprep.subr.mxu0 0.0
  %588 = vmatpush1.msra.mxu0 %v469
  %589 = vmatprep.subr.mxu0 0.0
  %590 = vmatpush1.msra.mxu0 %v470
  %591 = vmatprep.subr.mxu0 0.0
  %592 = vmatpush1.msra.mxu0 %v471
  %593 = vmatprep.subr.mxu0 0.0
  %594 = vmatpush1.msra.mxu0 %v472
  %595 = vmatprep.subr.mxu0 0.0
  %596 = vmatpush1.msra.mxu0 %v473
  %597 = vmatprep.subr.mxu0 0.0
  %598 = vmatpush1.msra.mxu0 %v474
  %599 = vmatprep.subr.mxu0 0.0
  %600 = vmatpush1.msra.mxu0 %v475
  %601 = vmatprep.subr.mxu0 0.0
  %602 = vmatpush1.msra.mxu0 %v476
  %603 = vmatprep.subr.mxu0 0.0
  %604 = vmatpush1.msra.mxu0 %v477
  %605 = vmatprep.subr.mxu0 0.0
  %606 = vmatpush1.msra.mxu0 %v478
  %607 = vmatprep.subr.mxu0 0.0
  %608 = vmatpush1.msra.mxu0 %v479
  %609 = vmatprep.subr.mxu0 0.0
  %610 = vmatpush1.msra.mxu0 %v480
  %611 = vmatprep.subr.mxu0 0.0
  %612 = vmatpush1.msra.mxu0 %v481
  %613 = vmatprep.subr.mxu0 0.0
  %614 = vmatpush1.msra.mxu0 %v482
  %615 = vmatprep.subr.mxu0 0.0
  %616 = vmatpush1.msra.mxu0 %v483
  %617 = vmatprep.subr.mxu0 0.0
  %618 = vmatpush1.msra.mxu0 %v484
  %619 = vmatprep.subr.mxu0 0.0
  %620 = vmatpush1.msra.mxu0 %v485
  %621 = vmatprep.subr.mxu0 0.0
  %622 = vmatpush1.msra.mxu0 %v486
  %623 = vmatprep.subr.mxu0 0.0
  %624 = vmatpush1.msra.mxu0 %v487
  %625 = vmatprep.subr.mxu0 0.0
  %626 = vmatpush1.msra.mxu0 0.0
  %627 = vmatprep.subr.mxu0 0.0
  %628 = vmatpush1.msra.mxu0 0.0
  %629 = vmatprep.subr.mxu0 0.0
  %630 = vmatpush1.msra.mxu0 0.0
  %631 = vmatprep.subr.mxu0 0.0
  %632 = vmatpush1.msra.mxu0 0.0
  %633 = vmatprep.subr.mxu0 0.0
  %634 = vmatpush1.msra.mxu0 0.0
  %635 = vmatprep.subr.mxu0 0.0
  %636 = vmatpush1.msra.mxu0 0.0
  %637 = vmatprep.subr.mxu0 0.0
  %638 = vmatpush1.msra.mxu0 0.0
  %639 = vmatprep.subr.mxu0 0.0
  %640 = vmatpush1.msra.mxu0 0.0
  %641 = vmatprep.subr.mxu0 0.0
  %642 = vmatpush1.msra.mxu0 0.0
  %643 = vmatprep.subr.mxu0 0.0
  %644 = vmatpush1.msra.mxu0 0.0
  %645 = vmatprep.subr.mxu0 0.0
  %646 = vmatpush1.msra.mxu0 0.0
  %647 = vmatprep.subr.mxu0 0.0
  %648 = vmatpush1.msra.mxu0 0.0
  %649 = vmatprep.mubr.f32.mxu0 %v490
  %650 = vmatmul.mubr.f32.gmra.mrb[0].mxu0 %v404
  %v651 = vpop.f32.mrb[0].mxu0
  %v652 = vadd.f32 0.0, %v651
  %v653 = vpop.f32.mrb[0].mxu0
  %654 = vmatprep.mubr.f32.mxu0 %v493
  %655 = vmatmul.mubr.f32.gmra.mrb[0].mxu0 %v406
  %v656 = vpop.f32.mrb[0].mxu0
  %v657 = vadd.f32 0.0, %v656
  %v658 = vpop.f32.mrb[0].mxu0
  %659 = vmatprep.mubr.f32.mxu0 %v496
  %660 = vmatmul.mubr.f32.gmra.mrb[0].mxu0 %v408
  %v661 = vpop.f32.mrb[0].mxu0
  %v662 = vadd.f32 0.0, %v661
  %v663 = vpop.f32.mrb[0].mxu0
  %664 = vmatprep.mubr.f32.mxu0 %v499
  %665 = vmatmul.mubr.f32.gmra.mrb[0].mxu0 %v410
  %v666 = vpop.f32.mrb[0].mxu0
  %v667 = vadd.f32 0.0, %v666
  %v668 = vpop.f32.mrb[0].mxu0
  %669 = vmatprep.mubr.f32.mxu0 %v502
  %670 = vmatmul.mubr.f32.gmra.mrb[0].mxu0 %v412
  %v671 = vpop.f32.mrb[0].mxu0
  %v672 = vadd.f32 0.0, %v671
  %v673 = vpop.f32.mrb[0].mxu0
  %674 = vmatprep.mubr.f32.mxu0 %v505
  %675 = vmatmul.mubr.f32.gmra.mrb[0].mxu0 %v414
  %v676 = vpop.f32.mrb[0].mxu0
  %v677 = vadd.f32 0.0, %v676
  %v678 = vpop.f32.mrb[0].mxu0
  %679 = vmatprep.mubr.f32.mxu0 %v508
  %680 = vmatmul.mubr.f32.gmra.mrb[0].mxu0 %v416
  %v681 = vpop.f32.mrb[0].mxu0
  %v682 = vadd.f32 0.0, %v681
  %v683 = vpop.f32.mrb[0].mxu0
  %684 = vmatprep.mubr.f32.mxu0 %v511
  %685 = vmatmul.mubr.f32.gmra.mrb[0].mxu0 %v418
  %v686 = vpop.f32.mrb[0].mxu0
  %v687 = vadd.f32 0.0, %v686
  %v688 = vpop.f32.mrb[0].mxu0
  %689 = vmatprep.mubr.f32.mxu0 %v514
  %690 = vmatmul.mubr.f32.gmra.mrb[0].mxu0 %v420
  %v691 = vpop.f32.mrb[0].mxu0
  %v692 = vadd.f32 0.0, %v691
  %v693 = vpop.f32.mrb[0].mxu0
  %694 = vmatprep.mubr.f32.mxu0 %v517
  %695 = vmatmul.mubr.f32.gmra.mrb[0].mxu0 %v422
  %v696 = vpop.f32.mrb[0].mxu0
  %v697 = vadd.f32 0.0, %v696
  %v698 = vpop.f32.mrb[0].mxu0
  %699 = vmatprep.mubr.f32.mxu0 %v520
  %700 = vmatmul.mubr.f32.gmra.mrb[0].mxu0 %v424
  %v701 = vpop.f32.mrb[0].mxu0
  %v702 = vadd.f32 0.0, %v701
  %v703 = vpop.f32.mrb[0].mxu0
  %704 = vmatprep.mubr.f32.mxu0 %v523
  %705 = vmatmul.mubr.f32.gmra.mrb[0].mxu0 %v426
  %v706 = vpop.f32.mrb[0].mxu0
  %v707 = vadd.f32 0.0, %v706
  %v708 = vpop.f32.mrb[0].mxu0
  %709 = vmatprep.mubr.f32.mxu0 %v526
  %710 = vmatmul.mubr.f32.gmra.mrb[0].mxu0 %v428
  %v711 = vpop.f32.mrb[0].mxu0
  %v712 = vadd.f32 0.0, %v711
  %v713 = vpop.f32.mrb[0].mxu0
  %714 = vmatprep.mubr.f32.mxu0 %v529
  %715 = vmatmul.mubr.f32.gmra.mrb[0].mxu0 %v430
  %v716 = vpop.f32.mrb[0].mxu0
  %v717 = vadd.f32 0.0, %v716
  %v718 = vpop.f32.mrb[0].mxu0
  %719 = vmatprep.mubr.f32.mxu0 %v532
  %720 = vmatmul.mubr.f32.gmra.mrb[0].mxu0 %v432
  %v721 = vpop.f32.mrb[0].mxu0
  %v722 = vadd.f32 0.0, %v721
  %v723 = vpop.f32.mrb[0].mxu0
  %724 = vmatprep.mubr.f32.mxu0 %v535
  %725 = vmatmul.mubr.f32.gmra.mrb[0].mxu0 %v434
  %v726 = vpop.f32.mrb[0].mxu0
  %v727 = vadd.f32 0.0, %v726
  %v728 = vpop.f32.mrb[0].mxu0
  %729 = vmatprep.mubr.f32.mxu0 %v538
  %730 = vmatmul.mubr.f32.gmra.mrb[0].mxu0 %v436
  %v731 = vpop.f32.mrb[0].mxu0
  %v732 = vadd.f32 0.0, %v731
  %v733 = vpop.f32.mrb[0].mxu0
  %734 = vmatprep.mubr.f32.mxu0 %v541
  %735 = vmatmul.mubr.f32.gmra.mrb[0].mxu0 %v438
  %v736 = vpop.f32.mrb[0].mxu0
  %v737 = vadd.f32 0.0, %v736
  %v738 = vpop.f32.mrb[0].mxu0
  %739 = vmatprep.mubr.f32.mxu0 %v544
  %740 = vmatmul.mubr.f32.gmra.mrb[0].mxu0 %v440
  %v741 = vpop.f32.mrb[0].mxu0
  %v742 = vadd.f32 0.0, %v741
  %v743 = vpop.f32.mrb[0].mxu0
  %744 = vmatprep.mubr.f32.mxu0 %v547
  %745 = vmatmul.mubr.f32.gmra.mrb[0].mxu0 %v442
  %v746 = vpop.f32.mrb[0].mxu0
  %v747 = vadd.f32 0.0, %v746
  %v748 = vpop.f32.mrb[0].mxu0
  %749 = vmatprep.mubr.f32.mxu0 %v550
  %750 = vmatmul.mubr.f32.gmra.mrb[0].mxu0 %v444
  %v751 = vpop.f32.mrb[0].mxu0
  %v752 = vadd.f32 0.0, %v751
  %v753 = vpop.f32.mrb[0].mxu0
  %754 = vmatprep.mubr.f32.mxu0 %v553
  %755 = vmatmul.mubr.f32.gmra.mrb[0].mxu0 %v446
  %v756 = vpop.f32.mrb[0].mxu0
  %v757 = vadd.f32 0.0, %v756
  %v758 = vpop.f32.mrb[0].mxu0
  %759 = vmatprep.mubr.f32.mxu0 %v556
  %760 = vmatmul.mubr.f32.gmra.mrb[0].mxu0 %v448
  %v761 = vpop.f32.mrb[0].mxu0
  %v762 = vadd.f32 0.0, %v761
  %v763 = vpop.f32.mrb[0].mxu0
  %764 = vmatprep.mubr.f32.mxu0 %v559
  %765 = vmatmul.mubr.f32.gmra.mrb[0].mxu0 %v450
  %v766 = vpop.f32.mrb[0].mxu0
  %v767 = vadd.f32 0.0, %v766
  %v768 = vpop.f32.mrb[0].mxu0
  %769 = vmatprep.mubr.f32.mxu0 %v562
  %770 = vmatmul.mubr.f32.gmra.mrb[0].mxu0 %v452
  %v771 = vpop.f32.mrb[0].mxu0
  %v772 = vadd.f32 0.0, %v771
  %v773 = vpop.f32.mrb[0].mxu0
  %774 = vmatprep.mubr.f32.mxu0 %v565
  %775 = vmatmul.mubr.f32.gmra.mrb[0].mxu0 %v454
  %v776 = vpop.f32.mrb[0].mxu0
  %v777 = vadd.f32 0.0, %v776
  %v778 = vpop.f32.mrb[0].mxu0
  %779 = vmatprep.mubr.f32.mxu0 %v568
  %780 = vmatmul.mubr.f32.gmra.mrb[0].mxu0 %v456
  %v781 = vpop.f32.mrb[0].mxu0
  %v782 = vadd.f32 0.0, %v781
  %v783 = vpop.f32.mrb[0].mxu0
  %784 = vmatprep.mubr.f32.mxu0 %v571
  %785 = vmatmul.mubr.f32.gmra.mrb[0].mxu0 %v458
  %v786 = vpop.f32.mrb[0].mxu0
  %v787 = vadd.f32 0.0, %v786
  %v788 = vpop.f32.mrb[0].mxu0
  %789 = vmatprep.mubr.f32.mxu0 %v574
  %790 = vmatmul.mubr.f32.gmra.mrb[0].mxu0 %v460
  %v791 = vpop.f32.mrb[0].mxu0
  %v792 = vadd.f32 0.0, %v791
  %v793 = vpop.f32.mrb[0].mxu0
  %794 = vmatprep.mubr.f32.mxu0 %v577
  %795 = vmatmul.mubr.f32.gmra.mrb[0].mxu0 %v462
  %v796 = vpop.f32.mrb[0].mxu0
  %v797 = vadd.f32 0.0, %v796
  %v798 = vpop.f32.mrb[0].mxu0
  %799 = vmatprep.mubr.f32.mxu0 %v580
  %800 = vmatmul.mubr.f32.gmra.mrb[0].mxu0 %v464
  %v801 = vpop.f32.mrb[0].mxu0
  %v802 = vadd.f32 0.0, %v801
  %v803 = vpop.f32.mrb[0].mxu0
  %804 = vmatprep.mubr.f32.mxu0 %v583
  %805 = vmatmul.mubr.f32.gmra.mrb[0].mxu0 %v466
  %v806 = vpop.f32.mrb[0].mxu0
  %v807 = vadd.f32 0.0, %v806
  %v808 = vpop.f32.mrb[0].mxu0
  %809 = vdwg.mxu0
  %vm810 = vcmask 64512
  %811 = vst.msk [vmem:[%s3] sm:$0xff] %vm810, %v652
  %812 = vst.msk [vmem:[%s3 + $0x8] sm:$0xff] %vm810, %v657
  %813 = vst.msk [vmem:[%s3 + $0x10] sm:$0xff] %vm810, %v662
  %814 = vst.msk [vmem:[%s3 + $0x18] sm:$0xff] %vm810, %v667
  %815 = vst.msk [vmem:[%s3 + $0x20] sm:$0xff] %vm810, %v672
  %816 = vst.msk [vmem:[%s3 + $0x28] sm:$0xff] %vm810, %v677
  %817 = vst.msk [vmem:[%s3 + $0x30] sm:$0xff] %vm810, %v682
  %818 = vst.msk [vmem:[%s3 + $0x38] sm:$0xff] %vm810, %v687
  %819 = vst.msk [vmem:[%s3 + $0x40] sm:$0xff] %vm810, %v692
  %820 = vst.msk [vmem:[%s3 + $0x48] sm:$0xff] %vm810, %v697
  %821 = vst.msk [vmem:[%s3 + $0x50] sm:$0xff] %vm810, %v702
  %822 = vst.msk [vmem:[%s3 + $0x58] sm:$0xff] %vm810, %v707
  %823 = vst.msk [vmem:[%s3 + $0x60] sm:$0xff] %vm810, %v712
  %824 = vst.msk [vmem:[%s3 + $0x68] sm:$0xff] %vm810, %v717
  %825 = vst.msk [vmem:[%s3 + $0x70] sm:$0xff] %vm810, %v722
  %826 = vst.msk [vmem:[%s3 + $0x78] sm:$0xff] %vm810, %v727
  %827 = vst.msk [vmem:[%s3 + $0x80] sm:$0xff] %vm810, %v732
  %828 = vst.msk [vmem:[%s3 + $0x88] sm:$0xff] %vm810, %v737
  %829 = vst.msk [vmem:[%s3 + $0x90] sm:$0xff] %vm810, %v742
  %830 = vst.msk [vmem:[%s3 + $0x98] sm:$0xff] %vm810, %v747
  %831 = vst.msk [vmem:[%s3 + $0xa0] sm:$0xff] %vm810, %v752
  %832 = vst.msk [vmem:[%s3 + $0xa8] sm:$0xff] %vm810, %v757
  %833 = vst.msk [vmem:[%s3 + $0xb0] sm:$0xff] %vm810, %v762
  %834 = vst.msk [vmem:[%s3 + $0xb8] sm:$0xff] %vm810, %v767
  %835 = vst.msk [vmem:[%s3 + $0xc0] sm:$0xff] %vm810, %v772
  %836 = vst.msk [vmem:[%s3 + $0xc8] sm:$0xff] %vm810, %v777
  %837 = vst.msk [vmem:[%s3 + $0xd0] sm:$0xff] %vm810, %v782
  %838 = vst.msk [vmem:[%s3 + $0xd8] sm:$0xff] %vm810, %v787
  %839 = vst.msk [vmem:[%s3 + $0xe0] sm:$0xff] %vm810, %v792
  %840 = vst.msk [vmem:[%s3 + $0xe8] sm:$0xff] %vm810, %v797
  %841 = vst.msk [vmem:[%s3 + $0xf0] sm:$0xff] %vm810, %v802
  %842 = vst.msk [vmem:[%s3 + $0xf8] sm:$0xff] %vm810, %v807
  // Predicated region
  $region14: #{tpu_custom_call.1} parent=0 // pred_check
    _
  $region15: #{tpu_custom_call.1} parent=0 // pred_check_branch
    %844 = sbr.rel (0) target = $region17
  $region16: #{tpu_custom_call.1} parent=0 // pred_region
    _
  $region17: #{tpu_custom_call.1} parent=0 // pred_fallthru
    _
  // Predicated region
  $region18: #{tpu_custom_call.1} parent=0 // pred_check
    _
  $region19: #{tpu_custom_call.1} parent=0 // pred_check_branch
    %846 = sbr.rel (0) target = $region21
  $region20: #{tpu_custom_call.1} parent=0 // pred_region
    _
  $region21: #{tpu_custom_call.1} parent=0 // pred_fallthru
    _

</llo_original>
